<compile_context>
chip_gen: v5e
topology: v5e:2x2
jax: 0.10.0
libtpu: 0.0.40
codegen_flags: <defaults>
</compile_context>

<pallas_src>
import math

import jax
import jax.numpy as jnp
from jax import lax
from jax.experimental import pallas as pl
from jax.experimental.pallas import tpu as pltpu

LANE = 128


def _round_up(x, m):
    return ((x + m - 1) // m) * m


# ------------------------- fused Pallas kernel -------------------------------

def _mirror_fused_kernel(patches_ref, mask_ref, w_e_ref, b_e_ref, q_ref,
                         wc_ref, bc_ref, logits_ref, cmap_ref, feat_s):
    # Per grid step (one batch item):
    #   patches_ref : (1, Lr, K)  bf16   im2col'd patches (only real rows)
    #   mask_ref    : (1, 1, LP)  f32    validity mask, zero on pads
    #   w_e_ref     : (K, D)      bf16   patch-embed weight
    #   b_e_ref     : (1, D)      f32    patch-embed bias
    #   q_ref       : (T, D)      bf16   learned next-character queries
    #   wc_ref      : (D, NCP)    bf16   classifier weight (lane-padded)
    #   bc_ref      : (1, NCP)    f32    classifier bias   (lane-padded)
    #   logits_ref  : (1, T, NCP) f32    output (lane-dense)
    #   cmap_ref    : (1, T, LP)  f32    output (lane-dense)
    #   feat_s      : (LP, D)     bf16   VMEM scratch for encoder features
    Lr = patches_ref.shape[1]
    LP, D = feat_s.shape
    scale = 1.0 / math.sqrt(D)

    # ---- encoder: patch embedding on real rows only (bf16 MXU, f32 acc)
    emb = (jnp.dot(patches_ref[0], w_e_ref[...],
                   preferred_element_type=jnp.float32)
           + b_e_ref[...])                                     # (Lr, D) f32

    # feat scratch: zero pad rows, store real rows (bf16 for the MXU).
    feat_s[...] = jnp.zeros_like(feat_s)
    feat_s[0:Lr, :] = emb.astype(feat_s.dtype)
    f = feat_s[...]                                            # (LP, D) bf16

    # ---- decoder: masked attention over LP(=128) keys, f32 softmax.
    q = q_ref[...]                                             # (T, D) bf16
    s = lax.dot_general(q, f, (((1,), (1,)), ((), ())),
                        preferred_element_type=jnp.float32) * scale   # (T, LP)
    mask_bias = (mask_ref[0] - 1.0) * 1e9                      # (1, LP) f32
    s = s + mask_bias
    s = s - jnp.max(s, axis=-1, keepdims=True)
    e = jnp.exp(s)
    p = e / jnp.sum(e, axis=-1, keepdims=True)                 # exact softmax

    cmap_ref[0] = p                                            # (T, LP) lane-dense

    ctx = jnp.dot(p.astype(jnp.bfloat16), f,
                  preferred_element_type=jnp.float32)          # (T, D) f32
    logits_ref[0] = (jnp.dot(ctx.astype(jnp.bfloat16), wc_ref[...],
                             preferred_element_type=jnp.float32)
                     + bc_ref[...])                            # (T, NCP) lane-dense


def mirror_fused_forward(patches, seq_mask_pad, w_embed, b_embed,
                         q_emb, w_cls_pad, b_cls_pad):
    """Single pallas_call: patch-embed -> masked attention -> classifier."""
    B, Lr, K = patches.shape
    LP = seq_mask_pad.shape[-1]
    T, D = q_emb.shape
    NCP = w_cls_pad.shape[1]
    # TODO(synk): for real focalnet sizes, tile M=B*L rows (and K) via the grid
    # instead of full-array weight blocks, and set vmem_limit_bytes for v7x.
    logits, cmaps = pl.pallas_call(
        _mirror_fused_kernel,
        grid=(B,),
        in_specs=[
            pl.BlockSpec((1, Lr, K), lambda b: (b, 0, 0)),
            pl.BlockSpec((1, 1, LP), lambda b: (b, 0, 0)),
            pl.BlockSpec((K, D), lambda b: (0, 0)),
            pl.BlockSpec((1, D), lambda b: (0, 0)),
            pl.BlockSpec((T, D), lambda b: (0, 0)),
            pl.BlockSpec((D, NCP), lambda b: (0, 0)),
            pl.BlockSpec((1, NCP), lambda b: (0, 0)),
        ],
        out_specs=[
            pl.BlockSpec((1, T, NCP), lambda b: (b, 0, 0)),
            pl.BlockSpec((1, T, LP), lambda b: (b, 0, 0)),
        ],
        out_shape=[
            jax.ShapeDtypeStruct((B, T, NCP), jnp.float32),
            jax.ShapeDtypeStruct((B, T, LP), jnp.float32),
        ],
        scratch_shapes=[pltpu.VMEM((LP, D), jnp.bfloat16)],
        compiler_params=pltpu.CompilerParams(
            dimension_semantics=("parallel",)),
    )(patches, seq_mask_pad, w_embed, b_embed, q_emb, w_cls_pad, b_cls_pad)
    return logits, cmaps


# ------------------------- MIRROR model --------------------------------------

class MIRROR:
    def __init__(self, num_classes, feat_dim=32, max_ch=8, iters=1,
                 in_ch=3, img_h=8, patch_w=4, key=None):
        if key is None:
            key = jax.random.PRNGKey(0)
        self.num_classes = num_classes
        self.max_ch = max_ch
        self.iters = max(iters, 1)
        self.patch_w = patch_w
        self.coef = (1.0, 0.01, 0.001)

        def tn(k, shape):  # trunc_normal_(std=0.02), bias = 0
            return 0.02 * jax.random.truncated_normal(k, -2.0, 2.0, shape,
                                                      jnp.float32)

        k1, k2, k3 = jax.random.split(key, 3)
        K = in_ch * img_h * patch_w
        self.w_embed = tn(k1, (K, feat_dim))
        self.b_embed = jnp.zeros((1, feat_dim), jnp.float32)
        self.q_emb = tn(k2, (max_ch, feat_dim))
        self.w_cls = tn(k3, (feat_dim, num_classes))
        self.b_cls = jnp.zeros((1, num_classes), jnp.float32)

        # classifier weights pre-padded once to a lane-dense (128) width.
        # (keep 128; pad to 256 only if num_classes grows past 128 -- v6e MXU)
        self.ncp = _round_up(num_classes, LANE)
        w_cls_pad = jnp.pad(self.w_cls, ((0, 0), (0, self.ncp - num_classes)))
        self.b_cls_pad = jnp.pad(self.b_cls,
                                 ((0, 0), (0, self.ncp - num_classes)))

        # bf16 copies of all MXU-side weights (kernel accumulates in f32).
        self.w_embed_bf = self.w_embed.astype(jnp.bfloat16)
        self.q_emb_bf = self.q_emb.astype(jnp.bfloat16)
        self.w_cls_pad_bf = w_cls_pad.astype(jnp.bfloat16)

    # ---- forward ---------------------------------------------------------
    def forward(self, x, mask, max_char=None, labels=None, label_lens=None):
        B, Cin, H, W = x.shape
        pw = self.patch_w
        L = W // pw
        Lr = _round_up(L, 8)          # sublane-rounded rows for the embed
        LP = _round_up(L, LANE)       # lane-dense attention / char-map width
        K = Cin * H * pw

        # im2col for Conv2d(kernel=(H,pw), stride=(H,pw)) -- cheap XLA glue.
        # TODO(synk): this gather could be expressed via BlockSpec index_map to
        # avoid materializing the patched tensor in HBM for large images.
        patches = (x.reshape(B, Cin, H, L, pw)
                     .transpose(0, 3, 1, 2, 4)
                     .reshape(B, L, K))
        patches = jnp.pad(patches, ((0, 0), (0, Lr - L), (0, 0)))
        patches = patches.astype(jnp.bfloat16)                 # (B, Lr, K)

        seq_mask = mask[:, 0, ::pw].astype(jnp.float32)        # (B, L)
        seq_mask_pad = jnp.pad(seq_mask, ((0, 0), (0, LP - L)))
        seq_mask_pad = seq_mask_pad.reshape(B, 1, LP)

        logits_pad, cmaps_pad = mirror_fused_forward(
            patches, seq_mask_pad, self.w_embed_bf, self.b_embed,
            self.q_emb_bf, self.w_cls_pad_bf, self.b_cls_pad)

        logits = logits_pad[:, :, :self.num_classes]           # (B, T, NC)
        cmaps = cmaps_pad[:, :, :L]                            # (B, T, L)

        # TODO(synk): the real NextCharacterDecoder iterates with updated state
        # (source not provided); the synthetic decoder is stateless, so the
        # kernel runs once and the result is reused for all iterations.
        logits_list = [logits] * self.iters
        cmaps_list = [cmaps] * self.iters

        ret = {'logits': logits_list, 'char_maps': cmaps_list}
        ret = self.update_with_loss(ret, labels, label_lens)
        return ret

    def update_with_loss(self, ret, labels=None, label_lens=None):
        if labels is not None:
            assert label_lens is not None
            ret.update(self.get_loss(ret, labels, label_lens))
        return ret

    # ---- losses (mirror of the PyTorch code, plain JAX glue, jit-safe) ----
    def calc_rec_loss(self, logits_bct, targets, target_lens, mask):
        # logits_bct: [B, C, T]; CrossEntropyLoss(reduction='none') over class dim
        logp = jax.nn.log_softmax(logits_bct, axis=1)
        nll = -jnp.take_along_axis(logp, targets[:, None, :], axis=1)[:, 0, :]
        losses = nll * mask
        loss = losses.sum(-1) / (target_lens.astype(jnp.float32) + 1e-10)
        return loss.mean()

    def calc_eos_loc_loss(self, char_maps, target_lens, eps=1e-10):
        B, _, max_tok = char_maps.shape
        eos_idx = jnp.broadcast_to((target_lens - 1)[:, None, None],
                                   (B, 1, max_tok))
        eos_maps = jnp.take_along_axis(char_maps, eos_idx, axis=1)[:, 0, :]
        loss = -jnp.log(eos_maps[:, -1] + eps)
        return loss.mean()

    def calc_entropy(self, p, mask, eps=1e-10):
        p_nlog = -jnp.log(p + eps)
        ent = (p * p_nlog).sum(-1) / math.log(p.shape[-1] + 1)
        ent = (ent * mask).sum(-1) / (mask.sum(-1) + eps)
        return ent.mean()

    def get_loss(self, model_output, labels, label_lens):
        batch_size, max_len = labels.shape
        seq_range = jnp.arange(max_len)[None, :]
        seq_len = label_lens[:, None]
        mask = (seq_range < seq_len).astype(jnp.float32)
        l_rec, l_eos, l_ent = [], [], []
        iters = len(model_output['logits'])
        for i in range(iters):
            l_rec.append(self.calc_rec_loss(
                jnp.transpose(model_output['logits'][i], (0, 2, 1)),
                labels, label_lens, mask))
            l_eos.append(self.calc_eos_loc_loss(model_output['char_maps'][i],
                                                label_lens))
            l_ent.append(self.calc_entropy(model_output['char_maps'][i], mask))

        # jit-safe replacement for `all(li.item() > 2.1)`: select on device
        # instead of syncing scalars to the host.
        all_high = jnp.all(jnp.stack(l_rec) > 2.1)

        def _select(ls):
            first_only = ls[0] + sum(ls[1:]) / (iters - 1 + 1e-08) * 0.0
            averaged = sum(ls) / iters
            return jnp.where(all_high, first_only, averaged)

        l_rec_f = _select(l_rec)
        l_eos_f = _select(l_eos)
        l_ent_f = _select(l_ent)
        loss = (l_rec_f * self.coef[0] + l_eos_f * self.coef[1]
                + l_ent_f * self.coef[2])
        return dict(loss=loss, l_rec=l_rec_f, l_eos=l_eos_f, l_ent=l_ent_f)


# ------------------------- demo ----------------------------------------------

if __name__ == "__main__":
    key = jax.random.PRNGKey(0)
    kx, kl, kp = jax.random.split(key, 3)

    B, Cin, H, W = 2, 3, 8, 32
    patch_w = 4
    NC, T, D = 40, 8, 32                     # num_classes, max chars, feat dim

    x = jax.random.normal(kx, (B, Cin, H, W), jnp.float32)
    mask = jnp.ones((B, H, W), jnp.float32)
    mask = mask.at[1, :, 24:].set(0.0)       # second sample: valid width 24
    labels = jax.random.randint(kl, (B, T), 0, NC)
    label_lens = jnp.array([8, 6], jnp.int32)

    model = MIRROR(num_classes=NC, feat_dim=D, max_ch=T, iters=1,
                   in_ch=Cin, img_h=H, patch_w=patch_w, key=kp)

    # one jitted program: im2col glue + fused Pallas kernel + losses.
    forward_fn = jax.jit(
        lambda x_, m_, lab_, ll_: model.forward(x_, m_, labels=lab_,
                                                label_lens=ll_))

    ret = forward_fn(x, mask, labels, label_lens)
    jax.block_until_ready(ret['logits'][0])
    jax.block_until_ready(ret['char_maps'][0])
    jax.block_until_ready(ret['loss'])
    print("KERNEL_OK")
</pallas_src>

<mosaic_0001>
module attributes {stable_mosaic.version = 11 : i64} {
  func.func @_mirror_fused_kernel(%arg0: i32, %arg1: memref<1x8x96xbf16, #tpu.memory_space<vmem>>, %arg2: memref<1x1x128xf32, #tpu.memory_space<vmem>>, %arg3: memref<96x32xbf16, #tpu.memory_space<vmem>>, %arg4: memref<1x32xf32, #tpu.memory_space<vmem>>, %arg5: memref<8x32xbf16, #tpu.memory_space<vmem>>, %arg6: memref<32x128xbf16, #tpu.memory_space<vmem>>, %arg7: memref<1x128xf32, #tpu.memory_space<vmem>>, %arg8: memref<1x8x128xf32, #tpu.memory_space<vmem>>, %arg9: memref<1x8x128xf32, #tpu.memory_space<vmem>>, %arg10: memref<128x32xbf16, #tpu.memory_space<vmem>>) attributes {dimension_semantics = [#tpu.dimension_semantics<parallel>], iteration_bounds = array<i64: 2>, scalar_prefetch = 0 : i64, scratch_operands = 1 : i64, tpu.core_type = #tpu.core_type<tc>, window_params = [{transform_indices = @transform_0, window_bounds = array<i64: 1, 8, 96>}, {transform_indices = @transform_1, window_bounds = array<i64: 1, 1, 128>}, {pipeline_mode = #tpu.pipeline_mode<synchronous>, transform_indices = @transform_2, window_bounds = array<i64: 96, 32>}, {pipeline_mode = #tpu.pipeline_mode<synchronous>, transform_indices = @transform_3, window_bounds = array<i64: 1, 32>}, {pipeline_mode = #tpu.pipeline_mode<synchronous>, transform_indices = @transform_4, window_bounds = array<i64: 8, 32>}, {pipeline_mode = #tpu.pipeline_mode<synchronous>, transform_indices = @transform_5, window_bounds = array<i64: 32, 128>}, {pipeline_mode = #tpu.pipeline_mode<synchronous>, transform_indices = @transform_6, window_bounds = array<i64: 1, 128>}, {transform_indices = @transform_7, window_bounds = array<i64: 1, 8, 128>}, {transform_indices = @transform_8, window_bounds = array<i64: 1, 8, 128>}]} {
    %c0 = arith.constant 0 : index
    %c0_0 = arith.constant 0 : index
    %c0_1 = arith.constant 0 : index
    %0 = vector.load %arg1[%c0, %c0_0, %c0_1] : memref<1x8x96xbf16, #tpu.memory_space<vmem>>, vector<1x8x96xbf16>
    %1 = vector.shape_cast %0 : vector<1x8x96xbf16> to vector<8x96xbf16>
    %c0_2 = arith.constant 0 : index
    %c0_3 = arith.constant 0 : index
    %2 = vector.load %arg3[%c0_2, %c0_3] : memref<96x32xbf16, #tpu.memory_space<vmem>>, vector<96x32xbf16>
    %cst = arith.constant dense<0.000000e+00> : vector<8x32xf32>
    %3 = tpu.matmul %1, %2, %cst {dimension_numbers = #tpu.dot_dimension_numbers<[1], [0], [0], [1], [0, 0, 1, 1], [], []>} : vector<8x96xbf16>, vector<96x32xbf16>, vector<8x32xf32> -> vector<8x32xf32>
    %c0_4 = arith.constant 0 : index
    %c0_5 = arith.constant 0 : index
    %4 = vector.load %arg4[%c0_4, %c0_5] : memref<1x32xf32, #tpu.memory_space<vmem>>, vector<1x32xf32>
    %5 = vector.broadcast %4 : vector<1x32xf32> to vector<8x32xf32>
    %6 = arith.addf %3, %5 : vector<8x32xf32>
    %cst_6 = arith.constant 0.000000e+00 : bf16
    %7 = vector.broadcast %cst_6 : bf16 to vector<128x32xbf16>
    %c0_7 = arith.constant 0 : index
    %c0_8 = arith.constant 0 : index
    %8 = vector.load %arg10[%c0_7, %c0_8] : memref<128x32xbf16, #tpu.memory_space<vmem>>, vector<128x32xbf16>
    tpu.vector_store %arg10[%c0_7, %c0_8], %7 {strides = array<i32>} : memref<128x32xbf16, #tpu.memory_space<vmem>>, vector<128x32xbf16>,
    %9 = arith.truncf %6 : vector<8x32xf32> to vector<8x32xbf16>
    %c0_9 = arith.constant 0 : index
    %c0_10 = arith.constant 0 : index
    %10 = vector.load %arg10[%c0_9, %c0_10] : memref<128x32xbf16, #tpu.memory_space<vmem>>, vector<8x32xbf16>
    tpu.vector_store %arg10[%c0_9, %c0_10], %9 {strides = array<i32>} : memref<128x32xbf16, #tpu.memory_space<vmem>>, vector<8x32xbf16>,
    %c0_11 = arith.constant 0 : index
    %c0_12 = arith.constant 0 : index
    %11 = vector.load %arg10[%c0_11, %c0_12] : memref<128x32xbf16, #tpu.memory_space<vmem>>, vector<128x32xbf16>
    %c0_13 = arith.constant 0 : index
    %c0_14 = arith.constant 0 : index
    %12 = vector.load %arg5[%c0_13, %c0_14] : memref<8x32xbf16, #tpu.memory_space<vmem>>, vector<8x32xbf16>
    %cst_15 = arith.constant dense<0.000000e+00> : vector<8x128xf32>
    %13 = tpu.matmul %12, %11, %cst_15 {dimension_numbers = #tpu.dot_dimension_numbers<[1], [1], [0], [0], [0, 0, 1, 0], [], []>} : vector<8x32xbf16>, vector<128x32xbf16>, vector<8x128xf32> -> vector<8x128xf32>
    %cst_16 = arith.constant 0.176776692 : f32
    %14 = vector.broadcast %cst_16 : f32 to vector<8x128xf32>
    %15 = arith.mulf %13, %14 : vector<8x128xf32>
    %c0_17 = arith.constant 0 : index
    %c0_18 = arith.constant 0 : index
    %c0_19 = arith.constant 0 : index
    %16 = vector.load %arg2[%c0_17, %c0_18, %c0_19] : memref<1x1x128xf32, #tpu.memory_space<vmem>>, vector<1x1x128xf32>
    %17 = vector.shape_cast %16 : vector<1x1x128xf32> to vector<1x128xf32>
    %cst_20 = arith.constant 1.000000e+00 : f32
    %18 = vector.broadcast %cst_20 : f32 to vector<1x128xf32>
    %19 = arith.subf %17, %18 : vector<1x128xf32>
    %cst_21 = arith.constant 1.000000e+09 : f32
    %20 = vector.broadcast %cst_21 : f32 to vector<1x128xf32>
    %21 = arith.mulf %19, %20 : vector<1x128xf32>
    %22 = vector.broadcast %21 : vector<1x128xf32> to vector<8x128xf32>
    %23 = arith.addf %15, %22 : vector<8x128xf32>
    %cst_22 = arith.constant dense<0xFF800000> : vector<8xf32>
    %24 = vector.multi_reduction <maximumf>, %23, %cst_22 [1] : vector<8x128xf32> to vector<8xf32>
    %25 = vector.shape_cast %24 : vector<8xf32> to vector<8x1xf32>
    %26 = vector.broadcast %25 : vector<8x1xf32> to vector<8x128xf32>
    %27 = arith.subf %23, %26 : vector<8x128xf32>
    %28 = math.exp %27 : vector<8x128xf32>
    %cst_23 = arith.constant dense<0.000000e+00> : vector<8xf32>
    %29 = vector.multi_reduction <add>, %28, %cst_23 [1] : vector<8x128xf32> to vector<8xf32>
    %30 = vector.shape_cast %29 : vector<8xf32> to vector<8x1xf32>
    %31 = vector.broadcast %30 : vector<8x1xf32> to vector<8x128xf32>
    %32 = arith.divf %28, %31 : vector<8x128xf32>
    %c0_24 = arith.constant 0 : index
    %c0_25 = arith.constant 0 : index
    %c0_26 = arith.constant 0 : index
    %33 = vector.load %arg9[%c0_24, %c0_25, %c0_26] : memref<1x8x128xf32, #tpu.memory_space<vmem>>, vector<1x8x128xf32>
    %34 = vector.shape_cast %33 : vector<1x8x128xf32> to vector<8x128xf32>
    %35 = vector.shape_cast %32 : vector<8x128xf32> to vector<1x8x128xf32>
    tpu.vector_store %arg9[%c0_24, %c0_25, %c0_26], %35 {strides = array<i32>} : memref<1x8x128xf32, #tpu.memory_space<vmem>>, vector<1x8x128xf32>,
    %36 = arith.truncf %32 : vector<8x128xf32> to vector<8x128xbf16>
    %cst_27 = arith.constant dense<0.000000e+00> : vector<8x32xf32>
    %37 = tpu.matmul %36, %11, %cst_27 {dimension_numbers = #tpu.dot_dimension_numbers<[1], [0], [0], [1], [0, 0, 1, 1], [], []>} : vector<8x128xbf16>, vector<128x32xbf16>, vector<8x32xf32> -> vector<8x32xf32>
    %38 = arith.truncf %37 : vector<8x32xf32> to vector<8x32xbf16>
    %c0_28 = arith.constant 0 : index
    %c0_29 = arith.constant 0 : index
    %39 = vector.load %arg6[%c0_28, %c0_29] : memref<32x128xbf16, #tpu.memory_space<vmem>>, vector<32x128xbf16>
    %cst_30 = arith.constant dense<0.000000e+00> : vector<8x128xf32>
    %40 = tpu.matmul %38, %39, %cst_30 {dimension_numbers = #tpu.dot_dimension_numbers<[1], [0], [0], [1], [0, 0, 1, 1], [], []>} : vector<8x32xbf16>, vector<32x128xbf16>, vector<8x128xf32> -> vector<8x128xf32>
    %c0_31 = arith.constant 0 : index
    %c0_32 = arith.constant 0 : index
    %41 = vector.load %arg7[%c0_31, %c0_32] : memref<1x128xf32, #tpu.memory_space<vmem>>, vector<1x128xf32>
    %42 = vector.broadcast %41 : vector<1x128xf32> to vector<8x128xf32>
    %43 = arith.addf %40, %42 : vector<8x128xf32>
    %c0_33 = arith.constant 0 : index
    %c0_34 = arith.constant 0 : index
    %c0_35 = arith.constant 0 : index
    %44 = vector.load %arg8[%c0_33, %c0_34, %c0_35] : memref<1x8x128xf32, #tpu.memory_space<vmem>>, vector<1x8x128xf32>
    %45 = vector.shape_cast %44 : vector<1x8x128xf32> to vector<8x128xf32>
    %46 = vector.shape_cast %43 : vector<8x128xf32> to vector<1x8x128xf32>
    tpu.vector_store %arg8[%c0_33, %c0_34, %c0_35], %46 {strides = array<i32>} : memref<1x8x128xf32, #tpu.memory_space<vmem>>, vector<1x8x128xf32>,
    return
  }
  func.func @transform_0(%arg0: i32) -> (i32, i32, i32) {
    %c0_i32 = arith.constant 0 : i32
    %c0_i32_0 = arith.constant 0 : i32
    %c0_i32_1 = arith.constant 0 : i32
    return %arg0, %c0_i32, %c0_i32_0 : i32, i32, i32
  }
  func.func @transform_1(%arg0: i32) -> (i32, i32, i32) {
    %c0_i32 = arith.constant 0 : i32
    %c0_i32_0 = arith.constant 0 : i32
    %c0_i32_1 = arith.constant 0 : i32
    return %arg0, %c0_i32, %c0_i32_0 : i32, i32, i32
  }
  func.func @transform_2(%arg0: i32) -> (i32, i32) {
    %c0_i32 = arith.constant 0 : i32
    %c0_i32_0 = arith.constant 0 : i32
    %c0_i32_1 = arith.constant 0 : i32
    return %c0_i32, %c0_i32_0 : i32, i32
  }
  func.func @transform_3(%arg0: i32) -> (i32, i32) {
    %c0_i32 = arith.constant 0 : i32
    %c0_i32_0 = arith.constant 0 : i32
    %c0_i32_1 = arith.constant 0 : i32
    return %c0_i32, %c0_i32_0 : i32, i32
  }
  func.func @transform_4(%arg0: i32) -> (i32, i32) {
    %c0_i32 = arith.constant 0 : i32
    %c0_i32_0 = arith.constant 0 : i32
    %c0_i32_1 = arith.constant 0 : i32
    return %c0_i32, %c0_i32_0 : i32, i32
  }
  func.func @transform_5(%arg0: i32) -> (i32, i32) {
    %c0_i32 = arith.constant 0 : i32
    %c0_i32_0 = arith.constant 0 : i32
    %c0_i32_1 = arith.constant 0 : i32
    return %c0_i32, %c0_i32_0 : i32, i32
  }
  func.func @transform_6(%arg0: i32) -> (i32, i32) {
    %c0_i32 = arith.constant 0 : i32
    %c0_i32_0 = arith.constant 0 : i32
    %c0_i32_1 = arith.constant 0 : i32
    return %c0_i32, %c0_i32_0 : i32, i32
  }
  func.func @transform_7(%arg0: i32) -> (i32, i32, i32) {
    %c0_i32 = arith.constant 0 : i32
    %c0_i32_0 = arith.constant 0 : i32
    %c0_i32_1 = arith.constant 0 : i32
    return %arg0, %c0_i32, %c0_i32_0 : i32, i32, i32
  }
  func.func @transform_8(%arg0: i32) -> (i32, i32, i32) {
    %c0_i32 = arith.constant 0 : i32
    %c0_i32_0 = arith.constant 0 : i32
    %c0_i32_1 = arith.constant 0 : i32
    return %arg0, %c0_i32, %c0_i32_0 : i32, i32, i32
  }
}

</mosaic_0001>

<llo_original>
// kernel: _lambda_.1
$region0: #{_lambda_.1}
  #allocation0 [shape = 'u32[]', space=smem, size = 0x4, offset = 0x4, fixed_abs, tag = 'smem constant byte address 0x4 - core index']
  #allocation1 [shape = 'u32[72,128]{1,0:T(1,128)}', space=vmem, size = 0x9000, scoped, tag = 'internal scratch']
  #allocation2 [shape = 'bf16[128,32]{1,0:T(8,128)(2,1)}', space=vmem, size = 0x8000, scoped, tag = 'scratch operand']
  %s0 = inlined_call_operand.vmem [shape: bf16[2,8,96], index: 0, kind: input, shape index: {}]
  %s1 = inlined_call_operand.vmem [shape: f32[2,1,128], index: 1, kind: input, shape index: {}]
  %s2 = inlined_call_operand.vmem [shape: bf16[96,32], index: 2, kind: input, shape index: {}]
  %s3 = inlined_call_operand.vmem [shape: f32[1,32], index: 3, kind: input, shape index: {}]
  %s4 = inlined_call_operand.vmem [shape: bf16[8,32], index: 4, kind: input, shape index: {}]
  %s5 = inlined_call_operand.vmem [shape: bf16[32,128], index: 5, kind: input, shape index: {}]
  %s6 = inlined_call_operand.vmem [shape: f32[1,128], index: 6, kind: input, shape index: {}]
  %s7 = inlined_call_operand.vmem [shape: f32[2,8,128], index: 7, kind: output, shape index: {0}]
  %s8 = inlined_call_operand.vmem [shape: f32[2,8,128], index: 8, kind: output, shape index: {1}]
  %9 = xla_tuple %s7, %s8
  %s10 = sld [smem:[#allocation0]]
  $region69: #{_lambda_.1} parent=0
    _
  %s12 = ssub.s32 1, %s10
  %s13 = scalar_select 0, %s12, %s10
  loop: start=0, step=1, limit=4
  $region2: #{_lambda_.1} parent=0 // loop_pre_header
    _
  $region3: #{_lambda_.1} parent=0 // loop_header
    %s15 = sphi 0, %s19
    %p16 = scmp.ge.s32.totalorder %s15, 4
    %s25 = sphi 0, %s27
    %s28 = sphi 0, %s25
    %s29 = sphi 0, %s28
    %s45 = sphi 0, %s29
    %s51 = sphi 0, %s53
    %s54 = sphi 0, %s51
    %s55 = sphi 0, %s54
    %s71 = sphi 0, %s55
    %s75 = sphi 0, %s75
    %s77 = sphi 0, %s75
    %s78 = sphi 0, %s77
    %s92 = sphi 0, %s78
    %s96 = sphi 0, %s96
    %s98 = sphi 0, %s96
    %s99 = sphi 0, %s98
    %s113 = sphi 0, %s99
    %s117 = sphi 0, %s117
    %s119 = sphi 0, %s117
    %s120 = sphi 0, %s119
    %s134 = sphi 0, %s120
    %s138 = sphi 0, %s138
    %s140 = sphi 0, %s138
    %s141 = sphi 0, %s140
    %s155 = sphi 0, %s141
    %s159 = sphi 0, %s159
    %s161 = sphi 0, %s159
    %s162 = sphi 0, %s161
    %s176 = sphi 0, %s162
    %s182 = sphi 0, %s184
    %s185 = sphi 0, %s182
    %s186 = sphi 0, %s185
    %s202 = sphi 0, %s186
    %s208 = sphi 0, %s210
    %s211 = sphi 0, %s208
    %s212 = sphi 0, %s211
    %s228 = sphi 0, %s212
  $region4: #{_lambda_.1} parent=0 // loop_header_branch
    %18 = sbr.rel (%p16) target = $region8
  $region5: #{_lambda_.1} parent=0 // loop_body
    %s20 = ssub.s32 %s15, 1
    %s21 = ssub.s32 %s15, 2
    %s22 = sadd.s32 %s15, 1
    %s23 = ssub.s32 %s15, %s22
    %p24 = scmp.eq.s32.totalorder %s23, 0
    %s26 = sadd.s32 %s25, 1
    %s27 = scalar_select %p24, %s25, %s26
    %p30 = pneg %p24
    %p31 = scmp.eq.s32.totalorder %s15, 1
    %p32 = por %p30, %p31
    %p33 = scmp.ne.s32.totalorder %s25, %s28
    %p34 = scmp.eq.s32.totalorder %s15, 0
    %p35 = por %p33, %p34
    %p36 = scmp.ne.s32.totalorder %s25, %s28
    %p37 = scmp.eq.s32.totalorder %s20, 1
    %p38 = por %p36, %p37
    %p39 = scmp.ne.s32.totalorder %s28, %s29
    %p40 = scmp.eq.s32.totalorder %s20, 0
    %p41 = por %p39, %p40
    %p42 = scmp.ne.s32.totalorder %s28, %s29
    %p43 = scmp.eq.s32.totalorder %s21, 1
    %p44 = por %p42, %p43
    %p46 = scmp.ne.s32.totalorder %s29, %s45
    %p47 = scmp.eq.s32.totalorder %s21, 0
    %p48 = por %p46, %p47
    %s49 = ssub.s32 %s15, %s22
    %p50 = scmp.eq.s32.totalorder %s49, 0
    %s52 = sadd.s32 %s51, 1
    %s53 = scalar_select %p50, %s51, %s52
    %p56 = pneg %p50
    %p57 = scmp.eq.s32.totalorder %s15, 1
    %p58 = por %p56, %p57
    %p59 = scmp.ne.s32.totalorder %s51, %s54
    %p60 = scmp.eq.s32.totalorder %s15, 0
    %p61 = por %p59, %p60
    %p62 = scmp.ne.s32.totalorder %s51, %s54
    %p63 = scmp.eq.s32.totalorder %s20, 1
    %p64 = por %p62, %p63
    %p65 = scmp.ne.s32.totalorder %s54, %s55
    %p66 = scmp.eq.s32.totalorder %s20, 0
    %p67 = por %p65, %p66
    %p68 = scmp.ne.s32.totalorder %s54, %s55
    %p69 = scmp.eq.s32.totalorder %s21, 1
    %p70 = por %p68, %p69
    %p72 = scmp.ne.s32.totalorder %s55, %s71
    %p73 = scmp.eq.s32.totalorder %s21, 0
    %p74 = por %p72, %p73
    %s76 = sadd.s32 %s75, 1
    %p79 = scmp.eq.s32.totalorder %s15, 1
    %p80 = scmp.ne.s32.totalorder %s75, %s77
    %p81 = scmp.eq.s32.totalorder %s15, 0
    %p82 = por %p80, %p81
    %p83 = scmp.ne.s32.totalorder %s75, %s77
    %p84 = scmp.eq.s32.totalorder %s20, 1
    %p85 = por %p83, %p84
    %p86 = scmp.ne.s32.totalorder %s77, %s78
    %p87 = scmp.eq.s32.totalorder %s20, 0
    %p88 = por %p86, %p87
    %p89 = scmp.ne.s32.totalorder %s77, %s78
    %p90 = scmp.eq.s32.totalorder %s21, 1
    %p91 = por %p89, %p90
    %p93 = scmp.ne.s32.totalorder %s78, %s92
    %p94 = scmp.eq.s32.totalorder %s21, 0
    %p95 = por %p93, %p94
    %s97 = sadd.s32 %s96, 1
    %p100 = scmp.eq.s32.totalorder %s15, 1
    %p101 = scmp.ne.s32.totalorder %s96, %s98
    %p102 = scmp.eq.s32.totalorder %s15, 0
    %p103 = por %p101, %p102
    %p104 = scmp.ne.s32.totalorder %s96, %s98
    %p105 = scmp.eq.s32.totalorder %s20, 1
    %p106 = por %p104, %p105
    %p107 = scmp.ne.s32.totalorder %s98, %s99
    %p108 = scmp.eq.s32.totalorder %s20, 0
    %p109 = por %p107, %p108
    %p110 = scmp.ne.s32.totalorder %s98, %s99
    %p111 = scmp.eq.s32.totalorder %s21, 1
    %p112 = por %p110, %p111
    %p114 = scmp.ne.s32.totalorder %s99, %s113
    %p115 = scmp.eq.s32.totalorder %s21, 0
    %p116 = por %p114, %p115
    %s118 = sadd.s32 %s117, 1
    %p121 = scmp.eq.s32.totalorder %s15, 1
    %p122 = scmp.ne.s32.totalorder %s117, %s119
    %p123 = scmp.eq.s32.totalorder %s15, 0
    %p124 = por %p122, %p123
    %p125 = scmp.ne.s32.totalorder %s117, %s119
    %p126 = scmp.eq.s32.totalorder %s20, 1
    %p127 = por %p125, %p126
    %p128 = scmp.ne.s32.totalorder %s119, %s120
    %p129 = scmp.eq.s32.totalorder %s20, 0
    %p130 = por %p128, %p129
    %p131 = scmp.ne.s32.totalorder %s119, %s120
    %p132 = scmp.eq.s32.totalorder %s21, 1
    %p133 = por %p131, %p132
    %p135 = scmp.ne.s32.totalorder %s120, %s134
    %p136 = scmp.eq.s32.totalorder %s21, 0
    %p137 = por %p135, %p136
    %s139 = sadd.s32 %s138, 1
    %p142 = scmp.eq.s32.totalorder %s15, 1
    %p143 = scmp.ne.s32.totalorder %s138, %s140
    %p144 = scmp.eq.s32.totalorder %s15, 0
    %p145 = por %p143, %p144
    %p146 = scmp.ne.s32.totalorder %s138, %s140
    %p147 = scmp.eq.s32.totalorder %s20, 1
    %p148 = por %p146, %p147
    %p149 = scmp.ne.s32.totalorder %s140, %s141
    %p150 = scmp.eq.s32.totalorder %s20, 0
    %p151 = por %p149, %p150
    %p152 = scmp.ne.s32.totalorder %s140, %s141
    %p153 = scmp.eq.s32.totalorder %s21, 1
    %p154 = por %p152, %p153
    %p156 = scmp.ne.s32.totalorder %s141, %s155
    %p157 = scmp.eq.s32.totalorder %s21, 0
    %p158 = por %p156, %p157
    %s160 = sadd.s32 %s159, 1
    %p163 = scmp.eq.s32.totalorder %s15, 1
    %p164 = scmp.ne.s32.totalorder %s159, %s161
    %p165 = scmp.eq.s32.totalorder %s15, 0
    %p166 = por %p164, %p165
    %p167 = scmp.ne.s32.totalorder %s159, %s161
    %p168 = scmp.eq.s32.totalorder %s20, 1
    %p169 = por %p167, %p168
    %p170 = scmp.ne.s32.totalorder %s161, %s162
    %p171 = scmp.eq.s32.totalorder %s20, 0
    %p172 = por %p170, %p171
    %p173 = scmp.ne.s32.totalorder %s161, %s162
    %p174 = scmp.eq.s32.totalorder %s21, 1
    %p175 = por %p173, %p174
    %p177 = scmp.ne.s32.totalorder %s162, %s176
    %p178 = scmp.eq.s32.totalorder %s21, 0
    %p179 = por %p177, %p178
    %s180 = ssub.s32 %s15, %s22
    %p181 = scmp.eq.s32.totalorder %s180, 0
    %s183 = sadd.s32 %s182, 1
    %s184 = scalar_select %p181, %s182, %s183
    %p187 = pneg %p181
    %p188 = scmp.eq.s32.totalorder %s15, 1
    %p189 = por %p187, %p188
    %p190 = scmp.ne.s32.totalorder %s182, %s185
    %p191 = scmp.eq.s32.totalorder %s15, 0
    %p192 = por %p190, %p191
    %p193 = scmp.ne.s32.totalorder %s182, %s185
    %p194 = scmp.eq.s32.totalorder %s20, 1
    %p195 = por %p193, %p194
    %p196 = scmp.ne.s32.totalorder %s185, %s186
    %p197 = scmp.eq.s32.totalorder %s20, 0
    %p198 = por %p196, %p197
    %p199 = scmp.ne.s32.totalorder %s185, %s186
    %p200 = scmp.eq.s32.totalorder %s21, 1
    %p201 = por %p199, %p200
    %p203 = scmp.ne.s32.totalorder %s186, %s202
    %p204 = scmp.eq.s32.totalorder %s21, 0
    %p205 = por %p203, %p204
    %s206 = ssub.s32 %s15, %s22
    %p207 = scmp.eq.s32.totalorder %s206, 0
    %s209 = sadd.s32 %s208, 1
    %s210 = scalar_select %p207, %s208, %s209
    %p213 = pneg %p207
    %p214 = scmp.eq.s32.totalorder %s15, 1
    %p215 = por %p213, %p214
    %p216 = scmp.ne.s32.totalorder %s208, %s211
    %p217 = scmp.eq.s32.totalorder %s15, 0
    %p218 = por %p216, %p217
    %p219 = scmp.ne.s32.totalorder %s208, %s211
    %p220 = scmp.eq.s32.totalorder %s20, 1
    %p221 = por %p219, %p220
    %p222 = scmp.ne.s32.totalorder %s211, %s212
    %p223 = scmp.eq.s32.totalorder %s20, 0
    %p224 = por %p222, %p223
    %p225 = scmp.ne.s32.totalorder %s211, %s212
    %p226 = scmp.eq.s32.totalorder %s21, 1
    %p227 = por %p225, %p226
    %p229 = scmp.ne.s32.totalorder %s212, %s228
    %p230 = scmp.eq.s32.totalorder %s21, 0
    %p231 = por %p229, %p230
    %p232 = scmp.le.s32.totalorder 1, %s15
    %p233 = scmp.lt.s32.totalorder %s15, 3
    %p234 = pnand %p232, %p233
    %p235 = pneg %p234
    // Predicated region
    $region9: #{_lambda_.1} parent=5 // pred_check
      _
    $region10: #{_lambda_.1} parent=5 // pred_check_branch
      %237 = sbr.rel (%p234) target = $region12
    $region11: #{_lambda_.1} parent=5 // pred_region
      %s238 = ssub.s32 %s15, 1
      // Predicated region
      $region13: #{_lambda_.1} parent=11 // pred_check
        %p239 = pneg %p88
      $region14: #{_lambda_.1} parent=11 // pred_check_branch
        %241 = sbr.rel (%p239) target = $region16
      $region15: #{_lambda_.1} parent=11 // pred_region
        _
      $region16: #{_lambda_.1} parent=11 // pred_fallthru
        _
      // Predicated region
      $region17: #{_lambda_.1} parent=11 // pred_check
        %p242 = pneg %p109
      $region18: #{_lambda_.1} parent=11 // pred_check_branch
        %244 = sbr.rel (%p242) target = $region20
      $region19: #{_lambda_.1} parent=11 // pred_region
        _
      $region20: #{_lambda_.1} parent=11 // pred_fallthru
        _
      // Predicated region
      $region21: #{_lambda_.1} parent=11 // pred_check
        %p245 = pneg %p130
      $region22: #{_lambda_.1} parent=11 // pred_check_branch
        %247 = sbr.rel (%p245) target = $region24
      $region23: #{_lambda_.1} parent=11 // pred_region
        _
      $region24: #{_lambda_.1} parent=11 // pred_fallthru
        _
      // Predicated region
      $region25: #{_lambda_.1} parent=11 // pred_check
        %p248 = pneg %p151
      $region26: #{_lambda_.1} parent=11 // pred_check_branch
        %250 = sbr.rel (%p248) target = $region28
      $region27: #{_lambda_.1} parent=11 // pred_region
        _
      $region28: #{_lambda_.1} parent=11 // pred_fallthru
        _
      // Predicated region
      $region29: #{_lambda_.1} parent=11 // pred_check
        %p251 = pneg %p172
      $region30: #{_lambda_.1} parent=11 // pred_check_branch
        %253 = sbr.rel (%p251) target = $region32
      $region31: #{_lambda_.1} parent=11 // pred_region
        _
      $region32: #{_lambda_.1} parent=11 // pred_fallthru
        _
    $region12: #{_lambda_.1} parent=5 // pred_fallthru
      _
    %p254 = scmp.lt.s32.totalorder %s15, 2
    // Predicated region
    $region33: #{_lambda_.1} parent=5 // pred_check
      %p255 = pneg %p254
    $region34: #{_lambda_.1} parent=5 // pred_check_branch
      %257 = sbr.rel (%p255) target = $region36
    $region35: #{_lambda_.1} parent=5 // pred_region
      // Predicated region
      $region37: #{_lambda_.1} parent=35 // pred_check
        %p258 = pneg %p35
      $region38: #{_lambda_.1} parent=35 // pred_check_branch
        %260 = sbr.rel (%p258) target = $region40
      $region39: #{_lambda_.1} parent=35 // pred_region
        %p261 = scmp.lt.s32.totalorder %s15, 1
        %s262 = scalar_select %p261, %s15, 1
        %s263 = smul.addr %s262, 4
        %s264 = scalar_lea.vmem %s0, %s263
      $region40: #{_lambda_.1} parent=35 // pred_fallthru
        _
      // Predicated region
      $region41: #{_lambda_.1} parent=35 // pred_check
        %p265 = pneg %p61
      $region42: #{_lambda_.1} parent=35 // pred_check_branch
        %267 = sbr.rel (%p265) target = $region44
      $region43: #{_lambda_.1} parent=35 // pred_region
        %p268 = scmp.lt.s32.totalorder %s15, 1
        %s269 = scalar_select %p268, %s15, 1
        %s270 = scalar_lea.vmem %s1, %s269
      $region44: #{_lambda_.1} parent=35 // pred_fallthru
        _
    $region36: #{_lambda_.1} parent=5 // pred_fallthru
      _
    %p271 = scmp.le.s32.totalorder 1, %s15
    %p272 = scmp.lt.s32.totalorder %s15, 3
    %p273 = pnand %p271, %p272
    %p274 = pneg %p273
    // Predicated region
    $region45: #{_lambda_.1} parent=5 // pred_check
      _
    $region46: #{_lambda_.1} parent=5 // pred_check_branch
      %276 = sbr.rel (%p273) target = $region48
    $region47: #{_lambda_.1} parent=5 // pred_region
      %s277 = ssub.s32 %s15, 1
      %p278 = scmp.lt.s32.totalorder %s20, 1
      %s279 = scalar_select %p278, %s20, 1
      %s280 = smul.addr %s279, 4
      %s281 = scalar_lea.vmem %s0, %s280
      %p282 = pneg %p41
      %p283 = pneg %p38
      %p284 = scmp.lt.s32.totalorder %s20, 1
      %s285 = scalar_select %p284, %s20, 1
      %s286 = scalar_lea.vmem %s1, %s285
      %p287 = pneg %p67
      %p288 = pneg %p64
      %p289 = pneg %p88
      %p290 = pneg %p85
      %p291 = pneg %p109
      %p292 = pneg %p106
      %p293 = pneg %p130
      %p294 = pneg %p127
      %p295 = pneg %p151
      %p296 = pneg %p148
      %p297 = pneg %p172
      %p298 = pneg %p169
      %p299 = pneg %p198
      %p300 = pneg %p195
      %p301 = scmp.lt.s32.totalorder %s20, 1
      %s302 = scalar_select %p301, %s20, 1
      %s303 = smul.addr %s302, 8
      %s304 = scalar_lea.vmem %s7, %s303
      %p305 = pneg %p224
      %p306 = pneg %p221
      %p307 = scmp.lt.s32.totalorder %s20, 1
      %s308 = scalar_select %p307, %s20, 1
      %s309 = smul.addr %s308, 8
      %s310 = scalar_lea.vmem %s8, %s309
      %p311 = scmp.lt.s32.totalorder %s20, 1
      %s312 = scalar_select %p311, %s20, 1
      %s313 = smul.addr %s312, 4
      %s314 = scalar_lea.vmem %s0, %s313
      %p315 = scmp.lt.s32.totalorder %s20, 1
      %s316 = scalar_select %p315, %s20, 1
      %s317 = scalar_lea.vmem %s1, %s316
      %p318 = scmp.lt.s32.totalorder %s20, 1
      %s319 = scalar_select %p318, %s20, 1
      %s320 = smul.addr %s319, 8
      %s321 = scalar_lea.vmem %s7, %s320
      %p322 = scmp.lt.s32.totalorder %s20, 1
      %s323 = scalar_select %p322, %s20, 1
      %s324 = smul.addr %s323, 8
      %s325 = scalar_lea.vmem %s8, %s324
      %v327 = vld [vmem:[%s314] sm:$0xf]
      %v328 = vld [vmem:[%s2] sm:$0xf]
      %v329 = vld [vmem:[%s2 + $0x4] sm:$0xf]
      %v330 = vld [vmem:[%s2 + $0x8] sm:$0xf]
      %v331 = vld [vmem:[%s2 + $0xc] sm:$0xf]
      %v332 = vld [vmem:[%s2 + $0x10] sm:$0xf]
      %v333 = vld [vmem:[%s2 + $0x14] sm:$0xf]
      %v334 = vld [vmem:[%s2 + $0x18] sm:$0xf]
      %v335 = vld [vmem:[%s2 + $0x1c] sm:$0xf]
      %v336 = vld [vmem:[%s2 + $0x20] sm:$0xf]
      %v337 = vld [vmem:[%s2 + $0x24] sm:$0xf]
      %v338 = vld [vmem:[%s2 + $0x28] sm:$0xf]
      %v339 = vld [vmem:[%s2 + $0x2c] sm:$0xf]
      %v340 = vld [vmem:[%s3] sm:$0x1]
      %v342 = vperm.slane %v340, 0
      %v356 = vunpack.c.l.b16 %v328
      %v357 = vunpack.c.l.b16 %v329
      %v358 = vunpack.c.l.b16 %v330
      %v359 = vunpack.c.l.b16 %v331
      %v360 = vunpack.c.l.b16 %v332
      %v361 = vunpack.c.l.b16 %v333
      %v362 = vunpack.c.l.b16 %v334
      %v363 = vunpack.c.l.b16 %v335
      %v364 = vunpack.c.l.b16 %v336
      %v365 = vunpack.c.l.b16 %v337
      %v366 = vunpack.c.l.b16 %v338
      %v367 = vunpack.c.l.b16 %v339
      %v368 = vpack.c.b16 %v357, %v356
      %v369 = vpack.c.b16 %v359, %v358
      %v370 = vpack.c.b16 %v361, %v360
      %v371 = vpack.c.b16 %v363, %v362
      %v372 = vpack.c.b16 %v365, %v364
      %v373 = vpack.c.b16 %v367, %v366
      %vm380 = vcmask 785408
      %v382 = vsel %vm380, %v327, 0
      %384 = vmatpush.bf16.msra.mxu0 0
      %385 = vmatpush.bf16.msra.mxu0 0
      %386 = vmatpush.bf16.msra.mxu0 %v373
      %387 = vmatpush.bf16.msra.mxu0 %v372
      %388 = vmatpush.bf16.msra.mxu0 %v371
      %389 = vmatpush.bf16.msra.mxu0 %v370
      %390 = vmatpush.bf16.msra.mxu0 %v369
      %391 = vmatpush.bf16.msra.mxu0 %v368
      %392 = vmatmul.bf16.gmra.mxu0 %v382
      %v393 = vpop.f32.mrf.mxu0
      %v394 = vadd.f32 %v342, %v393
      %v395 = vpop.f32.mrf.mxu0
      %396 = vdwg.mxu0
      %vm397 = vcmask 257024
      %398 = vst.msk [vmem:[#allocation2] sm:$0xf] %vm397, 0
      %399 = vst.msk [vmem:[#allocation2 + $0x4] sm:$0xf] %vm397, 0
      %400 = vst.msk [vmem:[#allocation2 + $0x8] sm:$0xf] %vm397, 0
      %401 = vst.msk [vmem:[#allocation2 + $0xc] sm:$0xf] %vm397, 0
      %402 = vst.msk [vmem:[#allocation2 + $0x10] sm:$0xf] %vm397, 0
      %403 = vst.msk [vmem:[#allocation2 + $0x14] sm:$0xf] %vm397, 0
      %404 = vst.msk [vmem:[#allocation2 + $0x18] sm:$0xf] %vm397, 0
      %405 = vst.msk [vmem:[#allocation2 + $0x1c] sm:$0xf] %vm397, 0
      %406 = vst.msk [vmem:[#allocation2 + $0x20] sm:$0xf] %vm397, 0
      %407 = vst.msk [vmem:[#allocation2 + $0x24] sm:$0xf] %vm397, 0
      %408 = vst.msk [vmem:[#allocation2 + $0x28] sm:$0xf] %vm397, 0
      %409 = vst.msk [vmem:[#allocation2 + $0x2c] sm:$0xf] %vm397, 0
      %410 = vst.msk [vmem:[#allocation2 + $0x30] sm:$0xf] %vm397, 0
      %411 = vst.msk [vmem:[#allocation2 + $0x34] sm:$0xf] %vm397, 0
      %412 = vst.msk [vmem:[#allocation2 + $0x38] sm:$0xf] %vm397, 0
      %413 = vst.msk [vmem:[#allocation2 + $0x3c] sm:$0xf] %vm397, 0
      %v414 = vpack.c.bf16 %v394, %v394
      %415 = vst.msk [vmem:[#allocation2] sm:$0xf] %vm397, %v414
      %v416 = vld [vmem:[#allocation2] sm:$0xf]
      %v417 = vld [vmem:[#allocation2 + $0x4] sm:$0xf]
      %v418 = vld [vmem:[#allocation2 + $0x8] sm:$0xf]
      %v419 = vld [vmem:[#allocation2 + $0xc] sm:$0xf]
      %v420 = vld [vmem:[#allocation2 + $0x10] sm:$0xf]
      %v421 = vld [vmem:[#allocation2 + $0x14] sm:$0xf]
      %v422 = vld [vmem:[#allocation2 + $0x18] sm:$0xf]
      %v423 = vld [vmem:[#allocation2 + $0x1c] sm:$0xf]
      %v424 = vld [vmem:[#allocation2 + $0x20] sm:$0xf]
      %v425 = vld [vmem:[#allocation2 + $0x24] sm:$0xf]
      %v426 = vld [vmem:[#allocation2 + $0x28] sm:$0xf]
      %v427 = vld [vmem:[#allocation2 + $0x2c] sm:$0xf]
      %v428 = vld [vmem:[#allocation2 + $0x30] sm:$0xf]
      %v429 = vld [vmem:[#allocation2 + $0x34] sm:$0xf]
      %v430 = vld [vmem:[#allocation2 + $0x38] sm:$0xf]
      %v431 = vld [vmem:[#allocation2 + $0x3c] sm:$0xf]
      %v432 = vld [vmem:[%s4] sm:$0xf]
      %v449 = vunpack.c.l.b16 %v416
      %v450 = vunpack.c.l.b16 %v417
      %v451 = vunpack.c.l.b16 %v418
      %v452 = vunpack.c.l.b16 %v419
      %v453 = vunpack.c.l.b16 %v420
      %v454 = vunpack.c.l.b16 %v421
      %v455 = vunpack.c.l.b16 %v422
      %v456 = vunpack.c.l.b16 %v423
      %v457 = vunpack.c.l.b16 %v424
      %v458 = vunpack.c.l.b16 %v425
      %v459 = vunpack.c.l.b16 %v426
      %v460 = vunpack.c.l.b16 %v427
      %v461 = vunpack.c.l.b16 %v428
      %v462 = vunpack.c.l.b16 %v429
      %v463 = vunpack.c.l.b16 %v430
      %v464 = vunpack.c.l.b16 %v431
      %v465 = vpack.c.b16 %v450, %v449
      %v466 = vpack.c.b16 %v452, %v451
      %v467 = vpack.c.b16 %v454, %v453
      %v468 = vpack.c.b16 %v456, %v455
      %v469 = vpack.c.b16 %v458, %v457
      %v470 = vpack.c.b16 %v460, %v459
      %v471 = vpack.c.b16 %v462, %v461
      %v472 = vpack.c.b16 %v464, %v463
      %vm473 = vcmask 261120
      %v475 = vsel %vm473, %v432, 0
      %v478 = vsel %vm473, %v465, 0
      %v481 = vsel %vm473, %v466, 0
      %v484 = vsel %vm473, %v467, 0
      %v487 = vsel %vm473, %v468, 0
      %v490 = vsel %vm473, %v469, 0
      %v493 = vsel %vm473, %v470, 0
      %v496 = vsel %vm473, %v471, 0
      %v499 = vsel %vm473, %v472, 0
      %501 = vmatpush.bf16.xpose.msra.mxu0 %v499
      %502 = vmatpush.bf16.xpose.msra.mxu0 %v496
      %503 = vmatpush.bf16.xpose.msra.mxu0 %v493
      %504 = vmatpush.bf16.xpose.msra.mxu0 %v490
      %505 = vmatpush.bf16.xpose.msra.mxu0 %v487
      %506 = vmatpush.bf16.xpose.msra.mxu0 %v484
      %507 = vmatpush.bf16.xpose.msra.mxu0 %v481
      %508 = vmatpush.bf16.xpose.msra.mxu0 %v478
      %509 = vmatmul.bf16.gmra.mxu0 %v475
      %v510 = vpop.f32.mrf.mxu0
      %v511 = vadd.f32 0.0, %v510
      %v512 = vpop.f32.mrf.mxu0
      %513 = vdwg.mxu0
      %v514 = vmul.f32 %v511, 0.17677669
      %v515 = vld [vmem:[%s317] sm:$0x1]
      %v516 = vsub.f32 %v515, 1.0
      %v517 = vmul.f32 %v516, 1e+09
      %v519 = vperm.slane %v517, 0
      %v521 = vadd.f32 %v514, %v519
      %522 = vmax.xlane.f32.xlu0 %v521
      %v523 = vpop.xlane.xlu0 %522
      %v524 = vsub.f32 %v521, %v523
      %v525 = vmul.f32 %v524, 1.442695
      %v526 = vpow.pop %v525
      %527 = vadd.xlane.f32.xlu0 %v526
      %v528 = vpop.xlane.xlu0 %527
      %v529 = vrcp.pop %v528
      %v530 = vmul.f32 %v528, %v529
      %v531 = vsub.f32 1.0, %v530
      %v532 = vmul.f32 %v529, %v531
      %v533 = vadd.f32 %v529, %v532
      %vm534 = vweird.f32 %v528
      %vm535 = vweird.f32 %v529
      %vm536 = vmor %vm534, %vm535
      %v537 = vsel %vm536, %v529, %v533
      %v538 = vand.u32 2147483647, %v528
      %vm539 = vcmp.eq.f32.partialorder %v538, 8.507059e+37
      %v540 = vand.u32 %v528, 2147483648
      %v541 = vor.u32 1.1754944e-38, %v540
      %v542 = vsel %vm539, %v541, %v537
      %v543 = vmul.f32 %v526, %v542
      %544 = vst [vmem:[%s325] sm:$0xff] %v543
      %v545 = vpack.c.bf16 %v543, %v543
      %554 = vmatpush.bf16.msra.mxu0 %v472
      %555 = vmatpush.bf16.msra.mxu0 %v471
      %556 = vmatpush.bf16.msra.mxu0 %v470
      %557 = vmatpush.bf16.msra.mxu0 %v469
      %558 = vmatpush.bf16.msra.mxu0 %v468
      %559 = vmatpush.bf16.msra.mxu0 %v467
      %560 = vmatpush.bf16.msra.mxu0 %v466
      %561 = vmatpush.bf16.msra.mxu0 %v465
      %562 = vmatmul.bf16.gmra.mxu0 %v545
      %v563 = vpop.f32.mrf.mxu0
      %v564 = vadd.f32 0.0, %v563
      %v565 = vpop.f32.mrf.mxu0
      %566 = vdwg.mxu0
      %v567 = vpack.c.bf16 %v564, %v564
      %v568 = vld [vmem:[%s5] sm:$0xf]
      %v569 = vld [vmem:[%s5 + $0x4] sm:$0xf]
      %v570 = vld [vmem:[%s5 + $0x8] sm:$0xf]
      %v571 = vld [vmem:[%s5 + $0xc] sm:$0xf]
      %v572 = vld [vmem:[%s6] sm:$0x1]
      %v574 = vperm.slane %v572, 0
      %v580 = vunpack.c.l.b16 %v568
      %v581 = vunpack.c.l.b16 %v569
      %v582 = vunpack.c.l.b16 %v570
      %v583 = vunpack.c.l.b16 %v571
      %v584 = vpack.c.b16 %v581, %v580
      %v585 = vpack.c.b16 %v583, %v582
      %v589 = vsel %vm473, %v567, 0
      %591 = vmatpush.bf16.msra.mxu0 0
      %592 = vmatpush.bf16.msra.mxu0 0
      %593 = vmatpush.bf16.msra.mxu0 0
      %594 = vmatpush.bf16.msra.mxu0 0
      %595 = vmatpush.bf16.msra.mxu0 0
      %596 = vmatpush.bf16.msra.mxu0 0
      %597 = vmatpush.bf16.msra.mxu0 %v585
      %598 = vmatpush.bf16.msra.mxu0 %v584
      %599 = vmatmul.bf16.gmra.mxu0 %v589
      %v600 = vpop.f32.mrf.mxu0
      %v601 = vadd.f32 %v574, %v600
      %v602 = vpop.f32.mrf.mxu0
      %603 = vdwg.mxu0
      %604 = vst [vmem:[%s321] sm:$0xff] %v601
      %p605 = scmp.lt.s32.totalorder %s20, 1
      %s606 = scalar_select %p605, %s20, 1
      %s607 = smul.addr %s606, 8
      %s608 = scalar_lea.vmem %s7, %s607
      %p609 = scmp.lt.s32.totalorder %s20, 1
      %s610 = scalar_select %p609, %s20, 1
      %s611 = smul.addr %s610, 8
      %s612 = scalar_lea.vmem %s8, %s611
      // Predicated region
      $region49: #{_lambda_.1} parent=47 // pred_check
        %p613 = pneg %p195
      $region50: #{_lambda_.1} parent=47 // pred_check_branch
        %615 = sbr.rel (%p613) target = $region52
      $region51: #{_lambda_.1} parent=47 // pred_region
        _
      $region52: #{_lambda_.1} parent=47 // pred_fallthru
        _
      // Predicated region
      $region53: #{_lambda_.1} parent=47 // pred_check
        %p616 = pneg %p221
      $region54: #{_lambda_.1} parent=47 // pred_check_branch
        %618 = sbr.rel (%p616) target = $region56
      $region55: #{_lambda_.1} parent=47 // pred_region
        _
      $region56: #{_lambda_.1} parent=47 // pred_fallthru
        _
    $region48: #{_lambda_.1} parent=5 // pred_fallthru
      _
    %p619 = scmp.le.s32.totalorder 2, %s15
    // Predicated region
    $region57: #{_lambda_.1} parent=5 // pred_check
      %p620 = pneg %p619
    $region58: #{_lambda_.1} parent=5 // pred_check_branch
      %622 = sbr.rel (%p620) target = $region60
    $region59: #{_lambda_.1} parent=5 // pred_region
      %s623 = ssub.s32 %s15, 2
      // Predicated region
      $region61: #{_lambda_.1} parent=59 // pred_check
        %p624 = pneg %p201
      $region62: #{_lambda_.1} parent=59 // pred_check_branch
        %626 = sbr.rel (%p624) target = $region64
      $region63: #{_lambda_.1} parent=59 // pred_region
        %p627 = scmp.lt.s32.totalorder %s21, 1
        %s628 = scalar_select %p627, %s21, 1
        %s629 = smul.addr %s628, 8
        %s630 = scalar_lea.vmem %s7, %s629
      $region64: #{_lambda_.1} parent=59 // pred_fallthru
        _
      // Predicated region
      $region65: #{_lambda_.1} parent=59 // pred_check
        %p631 = pneg %p227
      $region66: #{_lambda_.1} parent=59 // pred_check_branch
        %633 = sbr.rel (%p631) target = $region68
      $region67: #{_lambda_.1} parent=59 // pred_region
        %p634 = scmp.lt.s32.totalorder %s21, 1
        %s635 = scalar_select %p634, %s21, 1
        %s636 = smul.addr %s635, 8
        %s637 = scalar_lea.vmem %s8, %s636
      $region68: #{_lambda_.1} parent=59 // pred_fallthru
        _
    $region60: #{_lambda_.1} parent=5 // pred_fallthru
      _
  $region6: #{_lambda_.1} parent=0 // loop_footer
    %s19 = sadd.s32 1, %s15
  $region7: #{_lambda_.1} parent=0 // loop_footer_branch
    %14 = sbr.rel target = $region3
  $region8: #{_lambda_.1} parent=0 // loop_exit
    _

</llo_original>
